<compile_context>
chip_gen: v5e
topology: v5e:2x2
jax: 0.10.0
libtpu: 0.0.40
codegen_flags: <defaults>
</compile_context>

<pallas_src>
import math

import jax
import jax.numpy as jnp
from jax import lax
from jax.experimental import pallas as pl
from jax.experimental.pallas import tpu as pltpu

NEG_SLOPE = 0.01  # nn.LeakyReLU default


# ------------------------------ small helpers ------------------------------- #
def _interp_matrix_1d(in_size, out_size, dtype=jnp.float32):
    """Linear interpolation matrix (out_size, in_size), align_corners=True."""
    if out_size == 1:
        coords = jnp.zeros((1,), dtype)
    else:
        coords = jnp.arange(out_size, dtype=dtype) * (in_size - 1) / (out_size - 1)
    lo = jnp.clip(jnp.floor(coords), 0, in_size - 1).astype(jnp.int32)
    hi = jnp.minimum(lo + 1, in_size - 1)
    frac = coords - lo.astype(dtype)
    eye = jnp.eye(in_size, dtype=dtype)
    return (1.0 - frac)[:, None] * eye[lo] + frac[:, None] * eye[hi]


def _lerp_coeffs(in_size, out_size):
    """Static (python) 2-tap coefficients for align_corners linear interp."""
    lo, hi, frac = [], [], []
    for i in range(out_size):
        c = 0.0 if out_size == 1 else i * (in_size - 1) / (out_size - 1)
        l = min(int(math.floor(c)), in_size - 1)
        h = min(l + 1, in_size - 1)
        lo.append(l)
        hi.append(h)
        frac.append(float(c - l))
    return lo, hi, frac


def _im2col_per_depth(xp, D, H, W):
    """xp: (N, Cin, D+2, H+2, W+2) padded NCDHW (bf16)
       -> (N, D, 27*Cin, H*W) with tap axis ordered (kd, kh, kw, cin)."""
    N, Cin = xp.shape[0], xp.shape[1]
    taps = []
    for kd in range(3):
        for kh in range(3):
            for kw in range(3):
                t = xp[:, :, kd:kd + D, kh:kh + H, kw:kw + W]         # (N,Cin,D,H,W)
                t = t.reshape(N, Cin, D, H * W).transpose(0, 2, 1, 3)  # (N,D,Cin,HW)
                taps.append(t)
    return jnp.stack(taps, axis=2).reshape(N, D, 27 * Cin, H * W)


# ------------------------------ fused forward ------------------------------- #
def crfb_block(x, weight, bias, scale_factor):
    """x: (N, Cin, D, H, W); weight: (Cout, Cin, 3, 3, 3); bias: (Cout,)."""
    N, Cin, D, H, W = x.shape
    Cout = weight.shape[0]
    Do = int(math.floor(D * scale_factor))
    Ho = int(math.floor(H * scale_factor))
    Wo = int(math.floor(W * scale_factor))
    HW, HoWo, KC = H * W, Ho * Wo, 27 * Cin

    # im2col in bf16, already arranged per output-depth plane (see TODO above).
    x_bf = x.astype(jnp.bfloat16)
    xp = jnp.pad(x_bf, ((0, 0), (0, 0), (1, 1), (1, 1), (1, 1)))
    cols = _im2col_per_depth(xp, D, H, W)                       # (N, D, KC, HW)

    # (Cout, Cin, kd, kh, kw) -> (Cout, kd, kh, kw, Cin) -> (Cout, 27*Cin)
    w2 = jnp.transpose(weight, (0, 2, 3, 4, 1)).reshape(Cout, KC).astype(jnp.bfloat16)
    b2 = bias.reshape(Cout, 1).astype(jnp.float32)

    # In-plane interpolation matrix kron(Mh, Mw)^T, kept f32 for accuracy
    # (tiny matmul; bf16 would also fit the tolerance if perf demanded it).
    Mh = _interp_matrix_1d(H, Ho)
    Mw = _interp_matrix_1d(W, Wo)
    mhw_t = jnp.kron(Mh, Mw).T.astype(jnp.float32)              # (HW, HoWo)

    # Static depth-lerp taps (unrolled in the kernel).
    d_lo, d_hi, d_frac = _lerp_coeffs(D, Do)

    def fused_kernel(cols_ref, w_ref, b_ref, mhw_ref, o_ref):
        # cols_ref: (1, D, KC, HW) bf16   im2col patches for one batch element
        # w_ref:    (Cout, KC)     bf16   flattened conv weight
        # b_ref:    (Cout, 1)      f32    bias (sublane broadcast)
        # mhw_ref:  (HW, HoWo)     f32    kron(Mh, Mw)^T
        # o_ref:    (1, Do, Cout, HoWo) f32
        w = w_ref[...]
        b = b_ref[...]
        mhw = mhw_ref[...]

        # Conv (as matmul) + bias + LeakyReLU, one HW-plane per depth slice.
        # bf16 operands, f32 MXU accumulation; activation stays f32 from here.
        ys = []
        for d in range(D):                                      # static unroll
            yd = jnp.dot(w, cols_ref[0, d], preferred_element_type=jnp.float32)
            yd = yd + b
            yd = jnp.where(yd >= 0, yd, NEG_SLOPE * yd)         # LeakyReLU
            ys.append(yd)                                       # (Cout, HW)

        # In-plane (H, W) bilinear interp, batched over depth and channels.
        y_all = jnp.concatenate(ys, axis=0)                     # (D*Cout, HW)
        z = jnp.dot(y_all, mhw, preferred_element_type=jnp.float32)  # (D*Cout, HoWo)

        # Depth interpolation as a static 2-tap lerp (VPU), full-tile stores.
        for do in range(Do):                                    # static unroll
            lo, hi, f = d_lo[do], d_hi[do], d_frac[do]
            z_lo = z[lo * Cout:(lo + 1) * Cout, :]              # (Cout, HoWo)
            if f == 0.0 or lo == hi:
                slab = z_lo
            else:
                z_hi = z[hi * Cout:(hi + 1) * Cout, :]
                slab = (1.0 - f) * z_lo + f * z_hi
            o_ref[0, do] = slab

    out4 = pl.pallas_call(
        fused_kernel,
        out_shape=jax.ShapeDtypeStruct((N, Do, Cout, HoWo), jnp.float32),
        grid_spec=pltpu.PrefetchScalarGridSpec(
            num_scalar_prefetch=0,
            grid=(N,),
            in_specs=[
                pl.BlockSpec((1, D, KC, HW), lambda n: (n, 0, 0, 0)),
                pl.BlockSpec((Cout, KC), lambda n: (0, 0)),
                pl.BlockSpec((Cout, 1), lambda n: (0, 0)),
                pl.BlockSpec((HW, HoWo), lambda n: (0, 0)),
            ],
            out_specs=pl.BlockSpec((1, Do, Cout, HoWo), lambda n: (n, 0, 0, 0)),
        ),
        compiler_params=pltpu.CompilerParams(
            dimension_semantics=("parallel",),
        ),
    )(cols, w2, b2, mhw_t)

    # (N, Do, Cout, Ho*Wo) -> NCDHW (N, Cout, Do, Ho, Wo)
    return out4.transpose(0, 2, 1, 3).reshape(N, Cout, Do, Ho, Wo)


# --------------------------- pure-JAX reference ----------------------------- #
def _reference(x, weight, bias, scale_factor):
    y = lax.conv_general_dilated(
        x.astype(jnp.float32), weight.astype(jnp.float32),
        window_strides=(1, 1, 1),
        padding=((1, 1), (1, 1), (1, 1)),
        dimension_numbers=("NCDHW", "OIDHW", "NCDHW"),
    )
    y = y + bias[None, :, None, None, None]
    y = jnp.where(y >= 0, y, NEG_SLOPE * y)
    _, _, D, H, W = y.shape
    Do = int(math.floor(D * scale_factor))
    Ho = int(math.floor(H * scale_factor))
    Wo = int(math.floor(W * scale_factor))
    Md = _interp_matrix_1d(D, Do)
    Mh = _interp_matrix_1d(H, Ho)
    Mw = _interp_matrix_1d(W, Wo)
    return jnp.einsum("zd,yh,xw,ncdhw->nczyx", Md, Mh, Mw, y)


# ---------------------------------- main ------------------------------------ #
if __name__ == "__main__":
    key = jax.random.PRNGKey(0)
    kx, kw, kb = jax.random.split(key, 3)

    N, Cin, Cout = 2, 4, 8
    D = H = W = 6
    scale_factor = 2

    x = jax.random.normal(kx, (N, Cin, D, H, W), dtype=jnp.float32)
    weight = 0.1 * jax.random.normal(kw, (Cout, Cin, 3, 3, 3), dtype=jnp.float32)
    bias = 0.1 * jax.random.normal(kb, (Cout,), dtype=jnp.float32)

    out = crfb_block(x, weight, bias, scale_factor)
    out = jax.block_until_ready(out)

    ref = jax.block_until_ready(_reference(x, weight, bias, scale_factor))
    assert out.shape == ref.shape == (N, Cout, D * scale_factor, H * scale_factor, W * scale_factor)
    max_err = float(jnp.max(jnp.abs(out - ref)))
    # Only the conv operands are bf16 (f32 MXU accumulation); bias, LeakyReLU
    # and both interpolation stages are f32, so the error budget is small.
    assert max_err < 5e-2, f"max abs error too large: {max_err}"

    print("KERNEL_OK")
</pallas_src>

<mosaic_0001>
module attributes {stable_mosaic.version = 11 : i64} {
  func.func @fused_kernel(%arg0: i32, %arg1: memref<1x6x108x36xbf16, #tpu.memory_space<vmem>>, %arg2: memref<8x108xbf16, #tpu.memory_space<vmem>>, %arg3: memref<8x1xf32, #tpu.memory_space<vmem>>, %arg4: memref<36x144xf32, #tpu.memory_space<vmem>>, %arg5: memref<1x12x8x144xf32, #tpu.memory_space<vmem>>) attributes {dimension_semantics = [#tpu.dimension_semantics<parallel>], iteration_bounds = array<i64: 2>, scalar_prefetch = 0 : i64, scratch_operands = 0 : i64, tpu.core_type = #tpu.core_type<tc>, window_params = [{transform_indices = @transform_0, window_bounds = array<i64: 1, 6, 108, 36>}, {pipeline_mode = #tpu.pipeline_mode<synchronous>, transform_indices = @transform_1, window_bounds = array<i64: 8, 108>}, {pipeline_mode = #tpu.pipeline_mode<synchronous>, transform_indices = @transform_2, window_bounds = array<i64: 8, 1>}, {pipeline_mode = #tpu.pipeline_mode<synchronous>, transform_indices = @transform_3, window_bounds = array<i64: 36, 144>}, {transform_indices = @transform_4, window_bounds = array<i64: 1, 12, 8, 144>}]} {
    %c0 = arith.constant 0 : index
    %c0_0 = arith.constant 0 : index
    %0 = vector.load %arg2[%c0, %c0_0] : memref<8x108xbf16, #tpu.memory_space<vmem>>, vector<8x108xbf16>
    %c0_1 = arith.constant 0 : index
    %c0_2 = arith.constant 0 : index
    %1 = vector.load %arg3[%c0_1, %c0_2] : memref<8x1xf32, #tpu.memory_space<vmem>>, vector<8x1xf32>
    %c0_3 = arith.constant 0 : index
    %c0_4 = arith.constant 0 : index
    %2 = vector.load %arg4[%c0_3, %c0_4] : memref<36x144xf32, #tpu.memory_space<vmem>>, vector<36x144xf32>
    %c0_5 = arith.constant 0 : index
    %c0_6 = arith.constant 0 : index
    %c0_7 = arith.constant 0 : index
    %c0_8 = arith.constant 0 : index
    %3 = vector.load %arg1[%c0_5, %c0_6, %c0_7, %c0_8] : memref<1x6x108x36xbf16, #tpu.memory_space<vmem>>, vector<1x1x108x36xbf16>
    %4 = vector.shape_cast %3 : vector<1x1x108x36xbf16> to vector<108x36xbf16>
    %cst = arith.constant dense<0.000000e+00> : vector<8x36xf32>
    %5 = tpu.matmul %0, %4, %cst {dimension_numbers = #tpu.dot_dimension_numbers<[1], [0], [0], [1], [0, 0, 1, 1], [], []>} : vector<8x108xbf16>, vector<108x36xbf16>, vector<8x36xf32> -> vector<8x36xf32>
    %6 = vector.broadcast %1 : vector<8x1xf32> to vector<8x36xf32>
    %7 = arith.addf %5, %6 : vector<8x36xf32>
    %cst_9 = arith.constant 0.000000e+00 : f32
    %8 = vector.broadcast %cst_9 : f32 to vector<8x36xf32>
    %9 = arith.cmpf oge, %7, %8 : vector<8x36xf32>
    %cst_10 = arith.constant 0.00999999977 : f32
    %10 = vector.broadcast %cst_10 : f32 to vector<8x36xf32>
    %11 = arith.mulf %10, %7 : vector<8x36xf32>
    %12 = arith.select %9, %7, %11 : vector<8x36xi1>, vector<8x36xf32>
    %c0_11 = arith.constant 0 : index
    %c1 = arith.constant 1 : index
    %c0_12 = arith.constant 0 : index
    %c0_13 = arith.constant 0 : index
    %13 = vector.load %arg1[%c0_11, %c1, %c0_12, %c0_13] : memref<1x6x108x36xbf16, #tpu.memory_space<vmem>>, vector<1x1x108x36xbf16>
    %14 = vector.shape_cast %13 : vector<1x1x108x36xbf16> to vector<108x36xbf16>
    %cst_14 = arith.constant dense<0.000000e+00> : vector<8x36xf32>
    %15 = tpu.matmul %0, %14, %cst_14 {dimension_numbers = #tpu.dot_dimension_numbers<[1], [0], [0], [1], [0, 0, 1, 1], [], []>} : vector<8x108xbf16>, vector<108x36xbf16>, vector<8x36xf32> -> vector<8x36xf32>
    %16 = vector.broadcast %1 : vector<8x1xf32> to vector<8x36xf32>
    %17 = arith.addf %15, %16 : vector<8x36xf32>
    %cst_15 = arith.constant 0.000000e+00 : f32
    %18 = vector.broadcast %cst_15 : f32 to vector<8x36xf32>
    %19 = arith.cmpf oge, %17, %18 : vector<8x36xf32>
    %cst_16 = arith.constant 0.00999999977 : f32
    %20 = vector.broadcast %cst_16 : f32 to vector<8x36xf32>
    %21 = arith.mulf %20, %17 : vector<8x36xf32>
    %22 = arith.select %19, %17, %21 : vector<8x36xi1>, vector<8x36xf32>
    %c0_17 = arith.constant 0 : index
    %c2 = arith.constant 2 : index
    %c0_18 = arith.constant 0 : index
    %c0_19 = arith.constant 0 : index
    %23 = vector.load %arg1[%c0_17, %c2, %c0_18, %c0_19] : memref<1x6x108x36xbf16, #tpu.memory_space<vmem>>, vector<1x1x108x36xbf16>
    %24 = vector.shape_cast %23 : vector<1x1x108x36xbf16> to vector<108x36xbf16>
    %cst_20 = arith.constant dense<0.000000e+00> : vector<8x36xf32>
    %25 = tpu.matmul %0, %24, %cst_20 {dimension_numbers = #tpu.dot_dimension_numbers<[1], [0], [0], [1], [0, 0, 1, 1], [], []>} : vector<8x108xbf16>, vector<108x36xbf16>, vector<8x36xf32> -> vector<8x36xf32>
    %26 = vector.broadcast %1 : vector<8x1xf32> to vector<8x36xf32>
    %27 = arith.addf %25, %26 : vector<8x36xf32>
    %cst_21 = arith.constant 0.000000e+00 : f32
    %28 = vector.broadcast %cst_21 : f32 to vector<8x36xf32>
    %29 = arith.cmpf oge, %27, %28 : vector<8x36xf32>
    %cst_22 = arith.constant 0.00999999977 : f32
    %30 = vector.broadcast %cst_22 : f32 to vector<8x36xf32>
    %31 = arith.mulf %30, %27 : vector<8x36xf32>
    %32 = arith.select %29, %27, %31 : vector<8x36xi1>, vector<8x36xf32>
    %c0_23 = arith.constant 0 : index
    %c3 = arith.constant 3 : index
    %c0_24 = arith.constant 0 : index
    %c0_25 = arith.constant 0 : index
    %33 = vector.load %arg1[%c0_23, %c3, %c0_24, %c0_25] : memref<1x6x108x36xbf16, #tpu.memory_space<vmem>>, vector<1x1x108x36xbf16>
    %34 = vector.shape_cast %33 : vector<1x1x108x36xbf16> to vector<108x36xbf16>
    %cst_26 = arith.constant dense<0.000000e+00> : vector<8x36xf32>
    %35 = tpu.matmul %0, %34, %cst_26 {dimension_numbers = #tpu.dot_dimension_numbers<[1], [0], [0], [1], [0, 0, 1, 1], [], []>} : vector<8x108xbf16>, vector<108x36xbf16>, vector<8x36xf32> -> vector<8x36xf32>
    %36 = vector.broadcast %1 : vector<8x1xf32> to vector<8x36xf32>
    %37 = arith.addf %35, %36 : vector<8x36xf32>
    %cst_27 = arith.constant 0.000000e+00 : f32
    %38 = vector.broadcast %cst_27 : f32 to vector<8x36xf32>
    %39 = arith.cmpf oge, %37, %38 : vector<8x36xf32>
    %cst_28 = arith.constant 0.00999999977 : f32
    %40 = vector.broadcast %cst_28 : f32 to vector<8x36xf32>
    %41 = arith.mulf %40, %37 : vector<8x36xf32>
    %42 = arith.select %39, %37, %41 : vector<8x36xi1>, vector<8x36xf32>
    %c0_29 = arith.constant 0 : index
    %c4 = arith.constant 4 : index
    %c0_30 = arith.constant 0 : index
    %c0_31 = arith.constant 0 : index
    %43 = vector.load %arg1[%c0_29, %c4, %c0_30, %c0_31] : memref<1x6x108x36xbf16, #tpu.memory_space<vmem>>, vector<1x1x108x36xbf16>
    %44 = vector.shape_cast %43 : vector<1x1x108x36xbf16> to vector<108x36xbf16>
    %cst_32 = arith.constant dense<0.000000e+00> : vector<8x36xf32>
    %45 = tpu.matmul %0, %44, %cst_32 {dimension_numbers = #tpu.dot_dimension_numbers<[1], [0], [0], [1], [0, 0, 1, 1], [], []>} : vector<8x108xbf16>, vector<108x36xbf16>, vector<8x36xf32> -> vector<8x36xf32>
    %46 = vector.broadcast %1 : vector<8x1xf32> to vector<8x36xf32>
    %47 = arith.addf %45, %46 : vector<8x36xf32>
    %cst_33 = arith.constant 0.000000e+00 : f32
    %48 = vector.broadcast %cst_33 : f32 to vector<8x36xf32>
    %49 = arith.cmpf oge, %47, %48 : vector<8x36xf32>
    %cst_34 = arith.constant 0.00999999977 : f32
    %50 = vector.broadcast %cst_34 : f32 to vector<8x36xf32>
    %51 = arith.mulf %50, %47 : vector<8x36xf32>
    %52 = arith.select %49, %47, %51 : vector<8x36xi1>, vector<8x36xf32>
    %c0_35 = arith.constant 0 : index
    %c5 = arith.constant 5 : index
    %c0_36 = arith.constant 0 : index
    %c0_37 = arith.constant 0 : index
    %53 = vector.load %arg1[%c0_35, %c5, %c0_36, %c0_37] : memref<1x6x108x36xbf16, #tpu.memory_space<vmem>>, vector<1x1x108x36xbf16>
    %54 = vector.shape_cast %53 : vector<1x1x108x36xbf16> to vector<108x36xbf16>
    %cst_38 = arith.constant dense<0.000000e+00> : vector<8x36xf32>
    %55 = tpu.matmul %0, %54, %cst_38 {dimension_numbers = #tpu.dot_dimension_numbers<[1], [0], [0], [1], [0, 0, 1, 1], [], []>} : vector<8x108xbf16>, vector<108x36xbf16>, vector<8x36xf32> -> vector<8x36xf32>
    %56 = vector.broadcast %1 : vector<8x1xf32> to vector<8x36xf32>
    %57 = arith.addf %55, %56 : vector<8x36xf32>
    %cst_39 = arith.constant 0.000000e+00 : f32
    %58 = vector.broadcast %cst_39 : f32 to vector<8x36xf32>
    %59 = arith.cmpf oge, %57, %58 : vector<8x36xf32>
    %cst_40 = arith.constant 0.00999999977 : f32
    %60 = vector.broadcast %cst_40 : f32 to vector<8x36xf32>
    %61 = arith.mulf %60, %57 : vector<8x36xf32>
    %62 = arith.select %59, %57, %61 : vector<8x36xi1>, vector<8x36xf32>
    %63 = tpu.concatenate %12, %22, %32, %42, %52, %62 in 0 : vector<8x36xf32>, vector<8x36xf32>, vector<8x36xf32>, vector<8x36xf32>, vector<8x36xf32>, vector<8x36xf32> -> vector<48x36xf32>
    %cst_41 = arith.constant dense<0.000000e+00> : vector<48x144xf32>
    %64 = tpu.matmul %63, %2, %cst_41 {dimension_numbers = #tpu.dot_dimension_numbers<[1], [0], [0], [1], [0, 0, 1, 1], [], []>} : vector<48x36xf32>, vector<36x144xf32>, vector<48x144xf32> -> vector<48x144xf32>
    %65 = vector.extract_strided_slice %64 {offsets = [0, 0], sizes = [8, 144], strides = [1, 1]} : vector<48x144xf32> to vector<8x144xf32>
    %c0_42 = arith.constant 0 : index
    %c0_43 = arith.constant 0 : index
    %c0_44 = arith.constant 0 : index
    %c0_45 = arith.constant 0 : index
    %66 = vector.load %arg5[%c0_42, %c0_43, %c0_44, %c0_45] : memref<1x12x8x144xf32, #tpu.memory_space<vmem>>, vector<1x1x8x144xf32>
    %67 = vector.shape_cast %66 : vector<1x1x8x144xf32> to vector<8x144xf32>
    %68 = vector.shape_cast %65 : vector<8x144xf32> to vector<1x1x8x144xf32>
    tpu.vector_store %arg5[%c0_42, %c0_43, %c0_44, %c0_45], %68 {strides = array<i32>} : memref<1x12x8x144xf32, #tpu.memory_space<vmem>>, vector<1x1x8x144xf32>,
    %69 = vector.extract_strided_slice %64 {offsets = [0, 0], sizes = [8, 144], strides = [1, 1]} : vector<48x144xf32> to vector<8x144xf32>
    %70 = vector.extract_strided_slice %64 {offsets = [8, 0], sizes = [8, 144], strides = [1, 1]} : vector<48x144xf32> to vector<8x144xf32>
    %cst_46 = arith.constant 0.545454562 : f32
    %71 = vector.broadcast %cst_46 : f32 to vector<8x144xf32>
    %72 = arith.mulf %71, %69 : vector<8x144xf32>
    %cst_47 = arith.constant 0.454545468 : f32
    %73 = vector.broadcast %cst_47 : f32 to vector<8x144xf32>
    %74 = arith.mulf %73, %70 : vector<8x144xf32>
    %75 = arith.addf %72, %74 : vector<8x144xf32>
    %c0_48 = arith.constant 0 : index
    %c1_49 = arith.constant 1 : index
    %c0_50 = arith.constant 0 : index
    %c0_51 = arith.constant 0 : index
    %76 = vector.load %arg5[%c0_48, %c1_49, %c0_50, %c0_51] : memref<1x12x8x144xf32, #tpu.memory_space<vmem>>, vector<1x1x8x144xf32>
    %77 = vector.shape_cast %76 : vector<1x1x8x144xf32> to vector<8x144xf32>
    %78 = vector.shape_cast %75 : vector<8x144xf32> to vector<1x1x8x144xf32>
    tpu.vector_store %arg5[%c0_48, %c1_49, %c0_50, %c0_51], %78 {strides = array<i32>} : memref<1x12x8x144xf32, #tpu.memory_space<vmem>>, vector<1x1x8x144xf32>,
    %79 = vector.extract_strided_slice %64 {offsets = [0, 0], sizes = [8, 144], strides = [1, 1]} : vector<48x144xf32> to vector<8x144xf32>
    %80 = vector.extract_strided_slice %64 {offsets = [8, 0], sizes = [8, 144], strides = [1, 1]} : vector<48x144xf32> to vector<8x144xf32>
    %cst_52 = arith.constant 0.0909090936 : f32
    %81 = vector.broadcast %cst_52 : f32 to vector<8x144xf32>
    %82 = arith.mulf %81, %79 : vector<8x144xf32>
    %cst_53 = arith.constant 0.909090936 : f32
    %83 = vector.broadcast %cst_53 : f32 to vector<8x144xf32>
    %84 = arith.mulf %83, %80 : vector<8x144xf32>
    %85 = arith.addf %82, %84 : vector<8x144xf32>
    %c0_54 = arith.constant 0 : index
    %c2_55 = arith.constant 2 : index
    %c0_56 = arith.constant 0 : index
    %c0_57 = arith.constant 0 : index
    %86 = vector.load %arg5[%c0_54, %c2_55, %c0_56, %c0_57] : memref<1x12x8x144xf32, #tpu.memory_space<vmem>>, vector<1x1x8x144xf32>
    %87 = vector.shape_cast %86 : vector<1x1x8x144xf32> to vector<8x144xf32>
    %88 = vector.shape_cast %85 : vector<8x144xf32> to vector<1x1x8x144xf32>
    tpu.vector_store %arg5[%c0_54, %c2_55, %c0_56, %c0_57], %88 {strides = array<i32>} : memref<1x12x8x144xf32, #tpu.memory_space<vmem>>, vector<1x1x8x144xf32>,
    %89 = vector.extract_strided_slice %64 {offsets = [8, 0], sizes = [8, 144], strides = [1, 1]} : vector<48x144xf32> to vector<8x144xf32>
    %90 = vector.extract_strided_slice %64 {offsets = [16, 0], sizes = [8, 144], strides = [1, 1]} : vector<48x144xf32> to vector<8x144xf32>
    %cst_58 = arith.constant 0.636363626 : f32
    %91 = vector.broadcast %cst_58 : f32 to vector<8x144xf32>
    %92 = arith.mulf %91, %89 : vector<8x144xf32>
    %cst_59 = arith.constant 0.363636374 : f32
    %93 = vector.broadcast %cst_59 : f32 to vector<8x144xf32>
    %94 = arith.mulf %93, %90 : vector<8x144xf32>
    %95 = arith.addf %92, %94 : vector<8x144xf32>
    %c0_60 = arith.constant 0 : index
    %c3_61 = arith.constant 3 : index
    %c0_62 = arith.constant 0 : index
    %c0_63 = arith.constant 0 : index
    %96 = vector.load %arg5[%c0_60, %c3_61, %c0_62, %c0_63] : memref<1x12x8x144xf32, #tpu.memory_space<vmem>>, vector<1x1x8x144xf32>
    %97 = vector.shape_cast %96 : vector<1x1x8x144xf32> to vector<8x144xf32>
    %98 = vector.shape_cast %95 : vector<8x144xf32> to vector<1x1x8x144xf32>
    tpu.vector_store %arg5[%c0_60, %c3_61, %c0_62, %c0_63], %98 {strides = array<i32>} : memref<1x12x8x144xf32, #tpu.memory_space<vmem>>, vector<1x1x8x144xf32>,
    %99 = vector.extract_strided_slice %64 {offsets = [8, 0], sizes = [8, 144], strides = [1, 1]} : vector<48x144xf32> to vector<8x144xf32>
    %100 = vector.extract_strided_slice %64 {offsets = [16, 0], sizes = [8, 144], strides = [1, 1]} : vector<48x144xf32> to vector<8x144xf32>
    %cst_64 = arith.constant 0.181818187 : f32
    %101 = vector.broadcast %cst_64 : f32 to vector<8x144xf32>
    %102 = arith.mulf %101, %99 : vector<8x144xf32>
    %cst_65 = arith.constant 0.818181812 : f32
    %103 = vector.broadcast %cst_65 : f32 to vector<8x144xf32>
    %104 = arith.mulf %103, %100 : vector<8x144xf32>
    %105 = arith.addf %102, %104 : vector<8x144xf32>
    %c0_66 = arith.constant 0 : index
    %c4_67 = arith.constant 4 : index
    %c0_68 = arith.constant 0 : index
    %c0_69 = arith.constant 0 : index
    %106 = vector.load %arg5[%c0_66, %c4_67, %c0_68, %c0_69] : memref<1x12x8x144xf32, #tpu.memory_space<vmem>>, vector<1x1x8x144xf32>
    %107 = vector.shape_cast %106 : vector<1x1x8x144xf32> to vector<8x144xf32>
    %108 = vector.shape_cast %105 : vector<8x144xf32> to vector<1x1x8x144xf32>
    tpu.vector_store %arg5[%c0_66, %c4_67, %c0_68, %c0_69], %108 {strides = array<i32>} : memref<1x12x8x144xf32, #tpu.memory_space<vmem>>, vector<1x1x8x144xf32>,
    %109 = vector.extract_strided_slice %64 {offsets = [16, 0], sizes = [8, 144], strides = [1, 1]} : vector<48x144xf32> to vector<8x144xf32>
    %110 = vector.extract_strided_slice %64 {offsets = [24, 0], sizes = [8, 144], strides = [1, 1]} : vector<48x144xf32> to vector<8x144xf32>
    %cst_70 = arith.constant 0.727272749 : f32
    %111 = vector.broadcast %cst_70 : f32 to vector<8x144xf32>
    %112 = arith.mulf %111, %109 : vector<8x144xf32>
    %cst_71 = arith.constant 0.272727281 : f32
    %113 = vector.broadcast %cst_71 : f32 to vector<8x144xf32>
    %114 = arith.mulf %113, %110 : vector<8x144xf32>
    %115 = arith.addf %112, %114 : vector<8x144xf32>
    %c0_72 = arith.constant 0 : index
    %c5_73 = arith.constant 5 : index
    %c0_74 = arith.constant 0 : index
    %c0_75 = arith.constant 0 : index
    %116 = vector.load %arg5[%c0_72, %c5_73, %c0_74, %c0_75] : memref<1x12x8x144xf32, #tpu.memory_space<vmem>>, vector<1x1x8x144xf32>
    %117 = vector.shape_cast %116 : vector<1x1x8x144xf32> to vector<8x144xf32>
    %118 = vector.shape_cast %115 : vector<8x144xf32> to vector<1x1x8x144xf32>
    tpu.vector_store %arg5[%c0_72, %c5_73, %c0_74, %c0_75], %118 {strides = array<i32>} : memref<1x12x8x144xf32, #tpu.memory_space<vmem>>, vector<1x1x8x144xf32>,
    %119 = vector.extract_strided_slice %64 {offsets = [16, 0], sizes = [8, 144], strides = [1, 1]} : vector<48x144xf32> to vector<8x144xf32>
    %120 = vector.extract_strided_slice %64 {offsets = [24, 0], sizes = [8, 144], strides = [1, 1]} : vector<48x144xf32> to vector<8x144xf32>
    %cst_76 = arith.constant 0.272727281 : f32
    %121 = vector.broadcast %cst_76 : f32 to vector<8x144xf32>
    %122 = arith.mulf %121, %119 : vector<8x144xf32>
    %cst_77 = arith.constant 0.727272749 : f32
    %123 = vector.broadcast %cst_77 : f32 to vector<8x144xf32>
    %124 = arith.mulf %123, %120 : vector<8x144xf32>
    %125 = arith.addf %122, %124 : vector<8x144xf32>
    %c0_78 = arith.constant 0 : index
    %c6 = arith.constant 6 : index
    %c0_79 = arith.constant 0 : index
    %c0_80 = arith.constant 0 : index
    %126 = vector.load %arg5[%c0_78, %c6, %c0_79, %c0_80] : memref<1x12x8x144xf32, #tpu.memory_space<vmem>>, vector<1x1x8x144xf32>
    %127 = vector.shape_cast %126 : vector<1x1x8x144xf32> to vector<8x144xf32>
    %128 = vector.shape_cast %125 : vector<8x144xf32> to vector<1x1x8x144xf32>
    tpu.vector_store %arg5[%c0_78, %c6, %c0_79, %c0_80], %128 {strides = array<i32>} : memref<1x12x8x144xf32, #tpu.memory_space<vmem>>, vector<1x1x8x144xf32>,
    %129 = vector.extract_strided_slice %64 {offsets = [24, 0], sizes = [8, 144], strides = [1, 1]} : vector<48x144xf32> to vector<8x144xf32>
    %130 = vector.extract_strided_slice %64 {offsets = [32, 0], sizes = [8, 144], strides = [1, 1]} : vector<48x144xf32> to vector<8x144xf32>
    %cst_81 = arith.constant 0.818181812 : f32
    %131 = vector.broadcast %cst_81 : f32 to vector<8x144xf32>
    %132 = arith.mulf %131, %129 : vector<8x144xf32>
    %cst_82 = arith.constant 0.181818187 : f32
    %133 = vector.broadcast %cst_82 : f32 to vector<8x144xf32>
    %134 = arith.mulf %133, %130 : vector<8x144xf32>
    %135 = arith.addf %132, %134 : vector<8x144xf32>
    %c0_83 = arith.constant 0 : index
    %c7 = arith.constant 7 : index
    %c0_84 = arith.constant 0 : index
    %c0_85 = arith.constant 0 : index
    %136 = vector.load %arg5[%c0_83, %c7, %c0_84, %c0_85] : memref<1x12x8x144xf32, #tpu.memory_space<vmem>>, vector<1x1x8x144xf32>
    %137 = vector.shape_cast %136 : vector<1x1x8x144xf32> to vector<8x144xf32>
    %138 = vector.shape_cast %135 : vector<8x144xf32> to vector<1x1x8x144xf32>
    tpu.vector_store %arg5[%c0_83, %c7, %c0_84, %c0_85], %138 {strides = array<i32>} : memref<1x12x8x144xf32, #tpu.memory_space<vmem>>, vector<1x1x8x144xf32>,
    %139 = vector.extract_strided_slice %64 {offsets = [24, 0], sizes = [8, 144], strides = [1, 1]} : vector<48x144xf32> to vector<8x144xf32>
    %140 = vector.extract_strided_slice %64 {offsets = [32, 0], sizes = [8, 144], strides = [1, 1]} : vector<48x144xf32> to vector<8x144xf32>
    %cst_86 = arith.constant 0.363636374 : f32
    %141 = vector.broadcast %cst_86 : f32 to vector<8x144xf32>
    %142 = arith.mulf %141, %139 : vector<8x144xf32>
    %cst_87 = arith.constant 0.636363626 : f32
    %143 = vector.broadcast %cst_87 : f32 to vector<8x144xf32>
    %144 = arith.mulf %143, %140 : vector<8x144xf32>
    %145 = arith.addf %142, %144 : vector<8x144xf32>
    %c0_88 = arith.constant 0 : index
    %c8 = arith.constant 8 : index
    %c0_89 = arith.constant 0 : index
    %c0_90 = arith.constant 0 : index
    %146 = vector.load %arg5[%c0_88, %c8, %c0_89, %c0_90] : memref<1x12x8x144xf32, #tpu.memory_space<vmem>>, vector<1x1x8x144xf32>
    %147 = vector.shape_cast %146 : vector<1x1x8x144xf32> to vector<8x144xf32>
    %148 = vector.shape_cast %145 : vector<8x144xf32> to vector<1x1x8x144xf32>
    tpu.vector_store %arg5[%c0_88, %c8, %c0_89, %c0_90], %148 {strides = array<i32>} : memref<1x12x8x144xf32, #tpu.memory_space<vmem>>, vector<1x1x8x144xf32>,
    %149 = vector.extract_strided_slice %64 {offsets = [32, 0], sizes = [8, 144], strides = [1, 1]} : vector<48x144xf32> to vector<8x144xf32>
    %150 = vector.extract_strided_slice %64 {offsets = [40, 0], sizes = [8, 144], strides = [1, 1]} : vector<48x144xf32> to vector<8x144xf32>
    %cst_91 = arith.constant 0.909090936 : f32
    %151 = vector.broadcast %cst_91 : f32 to vector<8x144xf32>
    %152 = arith.mulf %151, %149 : vector<8x144xf32>
    %cst_92 = arith.constant 0.0909090936 : f32
    %153 = vector.broadcast %cst_92 : f32 to vector<8x144xf32>
    %154 = arith.mulf %153, %150 : vector<8x144xf32>
    %155 = arith.addf %152, %154 : vector<8x144xf32>
    %c0_93 = arith.constant 0 : index
    %c9 = arith.constant 9 : index
    %c0_94 = arith.constant 0 : index
    %c0_95 = arith.constant 0 : index
    %156 = vector.load %arg5[%c0_93, %c9, %c0_94, %c0_95] : memref<1x12x8x144xf32, #tpu.memory_space<vmem>>, vector<1x1x8x144xf32>
    %157 = vector.shape_cast %156 : vector<1x1x8x144xf32> to vector<8x144xf32>
    %158 = vector.shape_cast %155 : vector<8x144xf32> to vector<1x1x8x144xf32>
    tpu.vector_store %arg5[%c0_93, %c9, %c0_94, %c0_95], %158 {strides = array<i32>} : memref<1x12x8x144xf32, #tpu.memory_space<vmem>>, vector<1x1x8x144xf32>,
    %159 = vector.extract_strided_slice %64 {offsets = [32, 0], sizes = [8, 144], strides = [1, 1]} : vector<48x144xf32> to vector<8x144xf32>
    %160 = vector.extract_strided_slice %64 {offsets = [40, 0], sizes = [8, 144], strides = [1, 1]} : vector<48x144xf32> to vector<8x144xf32>
    %cst_96 = arith.constant 0.454545468 : f32
    %161 = vector.broadcast %cst_96 : f32 to vector<8x144xf32>
    %162 = arith.mulf %161, %159 : vector<8x144xf32>
    %cst_97 = arith.constant 0.545454562 : f32
    %163 = vector.broadcast %cst_97 : f32 to vector<8x144xf32>
    %164 = arith.mulf %163, %160 : vector<8x144xf32>
    %165 = arith.addf %162, %164 : vector<8x144xf32>
    %c0_98 = arith.constant 0 : index
    %c10 = arith.constant 10 : index
    %c0_99 = arith.constant 0 : index
    %c0_100 = arith.constant 0 : index
    %166 = vector.load %arg5[%c0_98, %c10, %c0_99, %c0_100] : memref<1x12x8x144xf32, #tpu.memory_space<vmem>>, vector<1x1x8x144xf32>
    %167 = vector.shape_cast %166 : vector<1x1x8x144xf32> to vector<8x144xf32>
    %168 = vector.shape_cast %165 : vector<8x144xf32> to vector<1x1x8x144xf32>
    tpu.vector_store %arg5[%c0_98, %c10, %c0_99, %c0_100], %168 {strides = array<i32>} : memref<1x12x8x144xf32, #tpu.memory_space<vmem>>, vector<1x1x8x144xf32>,
    %169 = vector.extract_strided_slice %64 {offsets = [40, 0], sizes = [8, 144], strides = [1, 1]} : vector<48x144xf32> to vector<8x144xf32>
    %c0_101 = arith.constant 0 : index
    %c11 = arith.constant 11 : index
    %c0_102 = arith.constant 0 : index
    %c0_103 = arith.constant 0 : index
    %170 = vector.load %arg5[%c0_101, %c11, %c0_102, %c0_103] : memref<1x12x8x144xf32, #tpu.memory_space<vmem>>, vector<1x1x8x144xf32>
    %171 = vector.shape_cast %170 : vector<1x1x8x144xf32> to vector<8x144xf32>
    %172 = vector.shape_cast %169 : vector<8x144xf32> to vector<1x1x8x144xf32>
    tpu.vector_store %arg5[%c0_101, %c11, %c0_102, %c0_103], %172 {strides = array<i32>} : memref<1x12x8x144xf32, #tpu.memory_space<vmem>>, vector<1x1x8x144xf32>,
    return
  }
  func.func @transform_0(%arg0: i32) -> (i32, i32, i32, i32) {
    %c0_i32 = arith.constant 0 : i32
    %c0_i32_0 = arith.constant 0 : i32
    %c0_i32_1 = arith.constant 0 : i32
    %c0_i32_2 = arith.constant 0 : i32
    return %arg0, %c0_i32, %c0_i32_0, %c0_i32_1 : i32, i32, i32, i32
  }
  func.func @transform_1(%arg0: i32) -> (i32, i32) {
    %c0_i32 = arith.constant 0 : i32
    %c0_i32_0 = arith.constant 0 : i32
    %c0_i32_1 = arith.constant 0 : i32
    return %c0_i32, %c0_i32_0 : i32, i32
  }
  func.func @transform_2(%arg0: i32) -> (i32, i32) {
    %c0_i32 = arith.constant 0 : i32
    %c0_i32_0 = arith.constant 0 : i32
    %c0_i32_1 = arith.constant 0 : i32
    return %c0_i32, %c0_i32_0 : i32, i32
  }
  func.func @transform_3(%arg0: i32) -> (i32, i32) {
    %c0_i32 = arith.constant 0 : i32
    %c0_i32_0 = arith.constant 0 : i32
    %c0_i32_1 = arith.constant 0 : i32
    return %c0_i32, %c0_i32_0 : i32, i32
  }
  func.func @transform_4(%arg0: i32) -> (i32, i32, i32, i32) {
    %c0_i32 = arith.constant 0 : i32
    %c0_i32_0 = arith.constant 0 : i32
    %c0_i32_1 = arith.constant 0 : i32
    %c0_i32_2 = arith.constant 0 : i32
    return %arg0, %c0_i32, %c0_i32_0, %c0_i32_1 : i32, i32, i32, i32
  }
}

</mosaic_0001>

<llo_original>
// kernel: tpu_custom_call.1
$region0: #{tpu_custom_call.1}
  #allocation0 [shape = 'u32[]', space=smem, size = 0x4, offset = 0x4, fixed_abs, tag = 'smem constant byte address 0x4 - core index']
  #allocation1 [shape = 'u32[72,128]{1,0:T(1,128)}', space=vmem, size = 0x9000, scoped, tag = 'internal scratch']
  %s0 = inlined_call_operand.vmem [shape: bf16[2,6,108,36], index: 0, kind: input, shape index: {}]
  %s1 = inlined_call_operand.vmem [shape: bf16[8,108], index: 1, kind: input, shape index: {}]
  %s2 = inlined_call_operand.vmem [shape: f32[8,1], index: 2, kind: input, shape index: {}]
  %s3 = inlined_call_operand.vmem [shape: f32[36,144], index: 3, kind: input, shape index: {}]
  %s4 = inlined_call_operand.hbm [shape: f32[2,12,8,144], index: 4, kind: output, shape index: {}]
  %s5 = sld [smem:[#allocation0]]
  $region49: #{tpu_custom_call.1} parent=0
    _
  %s7 = ssub.s32 1, %s5
  %s8 = scalar_select 0, %s7, %s5
  $region1: #{tpu_custom_call.1} parent=0
    #allocation2 [shape = 'u8[196608]{0}', space=vmem, size = 0x30000, scoped, tag = 'output window, operand 0']
    #allocation3 [shape = 's32[2]{0}', space=sflag, size = 0x8, scoped, tag = 'scoped memory for tpu_custom_call.1']
    %9 = vsyncpa [#allocation3], 0
    %s10 = scalar_lea.sflag [#allocation3], 1
    %11 = vsyncpa %s10, 0
    loop: start=0, step=1, limit=4
    $region2: #{tpu_custom_call.1} parent=1 // loop_pre_header
      _
    $region3: #{tpu_custom_call.1} parent=1 // loop_header
      %s13 = sphi 0, %s17
      %p14 = scmp.ge.s32.totalorder %s13, 4
      %s23 = sphi 0, %s25
      %s26 = sphi 0, %s23
      %s27 = sphi 0, %s26
      %s43 = sphi 0, %s27
      %s47 = sphi 0, %s47
      %s49 = sphi 0, %s47
      %s50 = sphi 0, %s49
      %s64 = sphi 0, %s50
      %s68 = sphi 0, %s68
      %s70 = sphi 0, %s68
      %s71 = sphi 0, %s70
      %s85 = sphi 0, %s71
      %s89 = sphi 0, %s89
      %s91 = sphi 0, %s89
      %s92 = sphi 0, %s91
      %s106 = sphi 0, %s92
      %s112 = sphi 0, %s114
      %s115 = sphi 0, %s112
      %s116 = sphi 0, %s115
      %s132 = sphi 0, %s116
    $region4: #{tpu_custom_call.1} parent=1 // loop_header_branch
      %16 = sbr.rel (%p14) target = $region8
    $region5: #{tpu_custom_call.1} parent=1 // loop_body
      %s18 = ssub.s32 %s13, 1
      %s19 = ssub.s32 %s13, 2
      %s20 = sadd.s32 %s13, 1
      %s21 = ssub.s32 %s13, %s20
      %p22 = scmp.eq.s32.totalorder %s21, 0
      %s24 = sadd.s32 %s23, 1
      %s25 = scalar_select %p22, %s23, %s24
      %p28 = pneg %p22
      %p29 = scmp.eq.s32.totalorder %s13, 1
      %p30 = por %p28, %p29
      %p31 = scmp.ne.s32.totalorder %s23, %s26
      %p32 = scmp.eq.s32.totalorder %s13, 0
      %p33 = por %p31, %p32
      %p34 = scmp.ne.s32.totalorder %s23, %s26
      %p35 = scmp.eq.s32.totalorder %s18, 1
      %p36 = por %p34, %p35
      %p37 = scmp.ne.s32.totalorder %s26, %s27
      %p38 = scmp.eq.s32.totalorder %s18, 0
      %p39 = por %p37, %p38
      %p40 = scmp.ne.s32.totalorder %s26, %s27
      %p41 = scmp.eq.s32.totalorder %s19, 1
      %p42 = por %p40, %p41
      %p44 = scmp.ne.s32.totalorder %s27, %s43
      %p45 = scmp.eq.s32.totalorder %s19, 0
      %p46 = por %p44, %p45
      %s48 = sadd.s32 %s47, 1
      %p51 = scmp.eq.s32.totalorder %s13, 1
      %p52 = scmp.ne.s32.totalorder %s47, %s49
      %p53 = scmp.eq.s32.totalorder %s13, 0
      %p54 = por %p52, %p53
      %p55 = scmp.ne.s32.totalorder %s47, %s49
      %p56 = scmp.eq.s32.totalorder %s18, 1
      %p57 = por %p55, %p56
      %p58 = scmp.ne.s32.totalorder %s49, %s50
      %p59 = scmp.eq.s32.totalorder %s18, 0
      %p60 = por %p58, %p59
      %p61 = scmp.ne.s32.totalorder %s49, %s50
      %p62 = scmp.eq.s32.totalorder %s19, 1
      %p63 = por %p61, %p62
      %p65 = scmp.ne.s32.totalorder %s50, %s64
      %p66 = scmp.eq.s32.totalorder %s19, 0
      %p67 = por %p65, %p66
      %s69 = sadd.s32 %s68, 1
      %p72 = scmp.eq.s32.totalorder %s13, 1
      %p73 = scmp.ne.s32.totalorder %s68, %s70
      %p74 = scmp.eq.s32.totalorder %s13, 0
      %p75 = por %p73, %p74
      %p76 = scmp.ne.s32.totalorder %s68, %s70
      %p77 = scmp.eq.s32.totalorder %s18, 1
      %p78 = por %p76, %p77
      %p79 = scmp.ne.s32.totalorder %s70, %s71
      %p80 = scmp.eq.s32.totalorder %s18, 0
      %p81 = por %p79, %p80
      %p82 = scmp.ne.s32.totalorder %s70, %s71
      %p83 = scmp.eq.s32.totalorder %s19, 1
      %p84 = por %p82, %p83
      %p86 = scmp.ne.s32.totalorder %s71, %s85
      %p87 = scmp.eq.s32.totalorder %s19, 0
      %p88 = por %p86, %p87
      %s90 = sadd.s32 %s89, 1
      %p93 = scmp.eq.s32.totalorder %s13, 1
      %p94 = scmp.ne.s32.totalorder %s89, %s91
      %p95 = scmp.eq.s32.totalorder %s13, 0
      %p96 = por %p94, %p95
      %p97 = scmp.ne.s32.totalorder %s89, %s91
      %p98 = scmp.eq.s32.totalorder %s18, 1
      %p99 = por %p97, %p98
      %p100 = scmp.ne.s32.totalorder %s91, %s92
      %p101 = scmp.eq.s32.totalorder %s18, 0
      %p102 = por %p100, %p101
      %p103 = scmp.ne.s32.totalorder %s91, %s92
      %p104 = scmp.eq.s32.totalorder %s19, 1
      %p105 = por %p103, %p104
      %p107 = scmp.ne.s32.totalorder %s92, %s106
      %p108 = scmp.eq.s32.totalorder %s19, 0
      %p109 = por %p107, %p108
      %s110 = ssub.s32 %s13, %s20
      %p111 = scmp.eq.s32.totalorder %s110, 0
      %s113 = sadd.s32 %s112, 1
      %s114 = scalar_select %p111, %s112, %s113
      %p117 = pneg %p111
      %p118 = scmp.eq.s32.totalorder %s13, 1
      %p119 = por %p117, %p118
      %p120 = scmp.ne.s32.totalorder %s112, %s115
      %p121 = scmp.eq.s32.totalorder %s13, 0
      %p122 = por %p120, %p121
      %p123 = scmp.ne.s32.totalorder %s112, %s115
      %p124 = scmp.eq.s32.totalorder %s18, 1
      %p125 = por %p123, %p124
      %p126 = scmp.ne.s32.totalorder %s115, %s116
      %p127 = scmp.eq.s32.totalorder %s18, 0
      %p128 = por %p126, %p127
      %p129 = scmp.ne.s32.totalorder %s115, %s116
      %p130 = scmp.eq.s32.totalorder %s19, 1
      %p131 = por %p129, %p130
      %p133 = scmp.ne.s32.totalorder %s116, %s132
      %p134 = scmp.eq.s32.totalorder %s19, 0
      %p135 = por %p133, %p134
      %p136 = scmp.le.s32.totalorder 1, %s13
      %p137 = scmp.lt.s32.totalorder %s13, 3
      %p138 = pnand %p136, %p137
      %p139 = pneg %p138
      // Predicated region
      $region9: #{tpu_custom_call.1} parent=5 // pred_check
        _
      $region10: #{tpu_custom_call.1} parent=5 // pred_check_branch
        %141 = sbr.rel (%p138) target = $region12
      $region11: #{tpu_custom_call.1} parent=5 // pred_region
        %s142 = ssub.s32 %s13, 1
        // Predicated region
        $region13: #{tpu_custom_call.1} parent=11 // pred_check
          %p143 = pneg %p60
        $region14: #{tpu_custom_call.1} parent=11 // pred_check_branch
          %145 = sbr.rel (%p143) target = $region16
        $region15: #{tpu_custom_call.1} parent=11 // pred_region
          _
        $region16: #{tpu_custom_call.1} parent=11 // pred_fallthru
          _
        // Predicated region
        $region17: #{tpu_custom_call.1} parent=11 // pred_check
          %p146 = pneg %p81
        $region18: #{tpu_custom_call.1} parent=11 // pred_check_branch
          %148 = sbr.rel (%p146) target = $region20
        $region19: #{tpu_custom_call.1} parent=11 // pred_region
          _
        $region20: #{tpu_custom_call.1} parent=11 // pred_fallthru
          _
        // Predicated region
        $region21: #{tpu_custom_call.1} parent=11 // pred_check
          %p149 = pneg %p102
        $region22: #{tpu_custom_call.1} parent=11 // pred_check_branch
          %151 = sbr.rel (%p149) target = $region24
        $region23: #{tpu_custom_call.1} parent=11 // pred_region
          _
        $region24: #{tpu_custom_call.1} parent=11 // pred_fallthru
          _
      $region12: #{tpu_custom_call.1} parent=5 // pred_fallthru
        _
      %p152 = scmp.lt.s32.totalorder %s13, 2
      // Predicated region
      $region25: #{tpu_custom_call.1} parent=5 // pred_check
        %p153 = pneg %p152
      $region26: #{tpu_custom_call.1} parent=5 // pred_check_branch
        %155 = sbr.rel (%p153) target = $region28
      $region27: #{tpu_custom_call.1} parent=5 // pred_region
        // Predicated region
        $region29: #{tpu_custom_call.1} parent=27 // pred_check
          %p156 = pneg %p33
        $region30: #{tpu_custom_call.1} parent=27 // pred_check_branch
          %158 = sbr.rel (%p156) target = $region32
        $region31: #{tpu_custom_call.1} parent=27 // pred_region
          %p159 = scmp.lt.s32.totalorder %s13, 1
          %s160 = scalar_select %p159, %s13, 1
          %s161 = smul.addr %s160, 84
          %s162 = smul.addr %s161, 4
          %s163 = scalar_lea.vmem %s0, %s162
        $region32: #{tpu_custom_call.1} parent=27 // pred_fallthru
          _
      $region28: #{tpu_custom_call.1} parent=5 // pred_fallthru
        _
      %p164 = scmp.le.s32.totalorder 1, %s13
      %p165 = scmp.lt.s32.totalorder %s13, 3
      %p166 = pnand %p164, %p165
      %p167 = pneg %p166
      // Predicated region
      $region33: #{tpu_custom_call.1} parent=5 // pred_check
        _
      $region34: #{tpu_custom_call.1} parent=5 // pred_check_branch
        %169 = sbr.rel (%p166) target = $region36
      $region35: #{tpu_custom_call.1} parent=5 // pred_region
        %s170 = ssub.s32 %s13, 1
        %p171 = scmp.lt.s32.totalorder %s18, 1
        %s172 = scalar_select %p171, %s18, 1
        %s173 = smul.addr %s172, 84
        %s174 = smul.addr %s173, 4
        %s175 = scalar_lea.vmem %s0, %s174
        %p176 = pneg %p39
        %p177 = pneg %p36
        %p178 = pneg %p60
        %p179 = pneg %p57
        %p180 = pneg %p81
        %p181 = pneg %p78
        %p182 = pneg %p102
        %p183 = pneg %p99
        %p184 = pneg %p128
        %p185 = pneg %p125
        %s186 = sand.u32 %s115, 1
        %s187 = scalar_lea.sflag [#allocation3], %s186
        %s188 = sand.u32 %s115, 1
        %s189 = smul.addr %s188, 192
        %s190 = scalar_lea.vmem [#allocation2], %s189
        %p191 = scmp.lt.s32.totalorder %s18, 1
        %s192 = scalar_select %p191, %s18, 1
        %s193 = smul.addr %s192, 84
        %s194 = smul.addr %s193, 4
        %s195 = scalar_lea.vmem %s0, %s194
        %v197 = vld [vmem:[%s1] sm:$0xf]
        %v198 = vld [vmem:[%s2] sm:$0xff]
        %v199 = vld [vmem:[%s3] sm:$0xff]
        %v200 = vld [vmem:[%s3 + $0x8] sm:$0xff]
        %v201 = vld [vmem:[%s3 + $0x10] sm:$0xff]
        %v202 = vld [vmem:[%s3 + $0x18] sm:$0xff]
        %v203 = vld [vmem:[%s3 + $0x20] sm:$0xff]
        %v204 = vld [vmem:[%s3 + $0x28] sm:$0xff]
        %v205 = vld [vmem:[%s3 + $0x30] sm:$0xff]
        %v206 = vld [vmem:[%s3 + $0x38] sm:$0xff]
        %v207 = vld [vmem:[%s3 + $0x40] sm:$0xf]
        %v208 = vld [vmem:[%s3 + $0x48] sm:$0xf]
        %v209 = vld [vmem:[%s195] sm:$0xf]
        %v210 = vld [vmem:[%s195 + $0x4] sm:$0xf]
        %v211 = vld [vmem:[%s195 + $0x8] sm:$0xf]
        %v212 = vld [vmem:[%s195 + $0xc] sm:$0xf]
        %v213 = vld [vmem:[%s195 + $0x10] sm:$0xf]
        %v214 = vld [vmem:[%s195 + $0x14] sm:$0xf]
        %v215 = vld [vmem:[%s195 + $0x18] sm:$0xf]
        %v216 = vld [vmem:[%s195 + $0x1c] sm:$0xf]
        %v217 = vld [vmem:[%s195 + $0x20] sm:$0xf]
        %v218 = vld [vmem:[%s195 + $0x24] sm:$0xf]
        %v219 = vld [vmem:[%s195 + $0x28] sm:$0xf]
        %v220 = vld [vmem:[%s195 + $0x2c] sm:$0xf]
        %v221 = vld [vmem:[%s195 + $0x30] sm:$0xf]
        %v222 = vld [vmem:[%s195 + $0x34] sm:$0x3]
        %224 = vset.pattern.permute.xlu0 0
        %225 = vperm.xlu0 %224, %v198
        %v226 = vpop.permute.xlu0 %225
        %v242 = vunpack.c.l.b16 %v209
        %v243 = vunpack.c.l.b16 %v210
        %v244 = vunpack.c.l.b16 %v211
        %v245 = vunpack.c.l.b16 %v212
        %v246 = vunpack.c.l.b16 %v213
        %v247 = vunpack.c.l.b16 %v214
        %v248 = vunpack.c.l.b16 %v215
        %v249 = vunpack.c.l.b16 %v216
        %v250 = vunpack.c.l.b16 %v217
        %v251 = vunpack.c.l.b16 %v218
        %v252 = vunpack.c.l.b16 %v219
        %v253 = vunpack.c.l.b16 %v220
        %v254 = vunpack.c.l.b16 %v221
        %v255 = vunpack.c.l.b16 %v222
        %v256 = vpack.c.b16 %v243, %v242
        %v257 = vpack.c.b16 %v245, %v244
        %v258 = vpack.c.b16 %v247, %v246
        %v259 = vpack.c.b16 %v249, %v248
        %v260 = vpack.c.b16 %v251, %v250
        %v261 = vpack.c.b16 %v253, %v252
        %v262 = vpack.c.b16 %v255, %v254
        %vm269 = vcmask 883712
        %v271 = vsel %vm269, %v197, 0
        %vm273 = vcmask 1045504
        %v275 = vsel %vm273, %v262, 0
        %277 = vmatpush.bf16.msra.mxu0 0
        %278 = vmatpush.bf16.msra.mxu0 %v275
        %279 = vmatpush.bf16.msra.mxu0 %v261
        %280 = vmatpush.bf16.msra.mxu0 %v260
        %281 = vmatpush.bf16.msra.mxu0 %v259
        %282 = vmatpush.bf16.msra.mxu0 %v258
        %283 = vmatpush.bf16.msra.mxu0 %v257
        %284 = vmatpush.bf16.msra.mxu0 %v256
        %285 = vmatmul.bf16.gmra.mxu0 %v271
        %v286 = vpop.f32.mrf.mxu0
        %v287 = vadd.f32 %v226, %v286
        %v288 = vpop.f32.mrf.mxu0
        %289 = vdwg.mxu0
        %vm290 = vcmp.ge.f32.partialorder %v287, 0.0
        %v291 = vmul.f32 %v287, 0.01
        %v292 = vsel %vm290, %v287, %v291
        %s293 = scalar_lea.vmem %s195, 56
        %v294 = vld [vmem:[%s293] sm:$0xf]
        %v295 = vld [vmem:[%s293 + $0x4] sm:$0xf]
        %v296 = vld [vmem:[%s293 + $0x8] sm:$0xf]
        %v297 = vld [vmem:[%s293 + $0xc] sm:$0xf]
        %v298 = vld [vmem:[%s293 + $0x10] sm:$0xf]
        %v299 = vld [vmem:[%s293 + $0x14] sm:$0xf]
        %v300 = vld [vmem:[%s293 + $0x18] sm:$0xf]
        %v301 = vld [vmem:[%s293 + $0x1c] sm:$0xf]
        %v302 = vld [vmem:[%s293 + $0x20] sm:$0xf]
        %v303 = vld [vmem:[%s293 + $0x24] sm:$0xf]
        %v304 = vld [vmem:[%s293 + $0x28] sm:$0xf]
        %v305 = vld [vmem:[%s293 + $0x2c] sm:$0xf]
        %v306 = vld [vmem:[%s293 + $0x30] sm:$0xf]
        %v307 = vld [vmem:[%s293 + $0x34] sm:$0x3]
        %v322 = vunpack.c.l.b16 %v294
        %v323 = vunpack.c.l.b16 %v295
        %v324 = vunpack.c.l.b16 %v296
        %v325 = vunpack.c.l.b16 %v297
        %v326 = vunpack.c.l.b16 %v298
        %v327 = vunpack.c.l.b16 %v299
        %v328 = vunpack.c.l.b16 %v300
        %v329 = vunpack.c.l.b16 %v301
        %v330 = vunpack.c.l.b16 %v302
        %v331 = vunpack.c.l.b16 %v303
        %v332 = vunpack.c.l.b16 %v304
        %v333 = vunpack.c.l.b16 %v305
        %v334 = vunpack.c.l.b16 %v306
        %v335 = vunpack.c.l.b16 %v307
        %v336 = vpack.c.b16 %v323, %v322
        %v337 = vpack.c.b16 %v325, %v324
        %v338 = vpack.c.b16 %v327, %v326
        %v339 = vpack.c.b16 %v329, %v328
        %v340 = vpack.c.b16 %v331, %v330
        %v341 = vpack.c.b16 %v333, %v332
        %v342 = vpack.c.b16 %v335, %v334
        %v350 = vsel %vm273, %v342, 0
        %352 = vmatpush.bf16.msra.mxu0 0
        %353 = vmatpush.bf16.msra.mxu0 %v350
        %354 = vmatpush.bf16.msra.mxu0 %v341
        %355 = vmatpush.bf16.msra.mxu0 %v340
        %356 = vmatpush.bf16.msra.mxu0 %v339
        %357 = vmatpush.bf16.msra.mxu0 %v338
        %358 = vmatpush.bf16.msra.mxu0 %v337
        %359 = vmatpush.bf16.msra.mxu0 %v336
        %360 = vmatmul.bf16.gmra.mxu0 %v271
        %v361 = vpop.f32.mrf.mxu0
        %v362 = vadd.f32 %v226, %v361
        %v363 = vpop.f32.mrf.mxu0
        %364 = vdwg.mxu0
        %vm365 = vcmp.ge.f32.partialorder %v362, 0.0
        %v366 = vmul.f32 %v362, 0.01
        %v367 = vsel %vm365, %v362, %v366
        %s368 = scalar_lea.vmem %s195, 112
        %v369 = vld [vmem:[%s368] sm:$0xf]
        %v370 = vld [vmem:[%s368 + $0x4] sm:$0xf]
        %v371 = vld [vmem:[%s368 + $0x8] sm:$0xf]
        %v372 = vld [vmem:[%s368 + $0xc] sm:$0xf]
        %v373 = vld [vmem:[%s368 + $0x10] sm:$0xf]
        %v374 = vld [vmem:[%s368 + $0x14] sm:$0xf]
        %v375 = vld [vmem:[%s368 + $0x18] sm:$0xf]
        %v376 = vld [vmem:[%s368 + $0x1c] sm:$0xf]
        %v377 = vld [vmem:[%s368 + $0x20] sm:$0xf]
        %v378 = vld [vmem:[%s368 + $0x24] sm:$0xf]
        %v379 = vld [vmem:[%s368 + $0x28] sm:$0xf]
        %v380 = vld [vmem:[%s368 + $0x2c] sm:$0xf]
        %v381 = vld [vmem:[%s368 + $0x30] sm:$0xf]
        %v382 = vld [vmem:[%s368 + $0x34] sm:$0x3]
        %v397 = vunpack.c.l.b16 %v369
        %v398 = vunpack.c.l.b16 %v370
        %v399 = vunpack.c.l.b16 %v371
        %v400 = vunpack.c.l.b16 %v372
        %v401 = vunpack.c.l.b16 %v373
        %v402 = vunpack.c.l.b16 %v374
        %v403 = vunpack.c.l.b16 %v375
        %v404 = vunpack.c.l.b16 %v376
        %v405 = vunpack.c.l.b16 %v377
        %v406 = vunpack.c.l.b16 %v378
        %v407 = vunpack.c.l.b16 %v379
        %v408 = vunpack.c.l.b16 %v380
        %v409 = vunpack.c.l.b16 %v381
        %v410 = vunpack.c.l.b16 %v382
        %v411 = vpack.c.b16 %v398, %v397
        %v412 = vpack.c.b16 %v400, %v399
        %v413 = vpack.c.b16 %v402, %v401
        %v414 = vpack.c.b16 %v404, %v403
        %v415 = vpack.c.b16 %v406, %v405
        %v416 = vpack.c.b16 %v408, %v407
        %v417 = vpack.c.b16 %v410, %v409
        %v425 = vsel %vm273, %v417, 0
        %427 = vmatpush.bf16.msra.mxu0 0
        %428 = vmatpush.bf16.msra.mxu0 %v425
        %429 = vmatpush.bf16.msra.mxu0 %v416
        %430 = vmatpush.bf16.msra.mxu0 %v415
        %431 = vmatpush.bf16.msra.mxu0 %v414
        %432 = vmatpush.bf16.msra.mxu0 %v413
        %433 = vmatpush.bf16.msra.mxu0 %v412
        %434 = vmatpush.bf16.msra.mxu0 %v411
        %435 = vmatmul.bf16.gmra.mxu0 %v271
        %v436 = vpop.f32.mrf.mxu0
        %v437 = vadd.f32 %v226, %v436
        %v438 = vpop.f32.mrf.mxu0
        %439 = vdwg.mxu0
        %vm440 = vcmp.ge.f32.partialorder %v437, 0.0
        %v441 = vmul.f32 %v437, 0.01
        %v442 = vsel %vm440, %v437, %v441
        %s443 = scalar_lea.vmem %s195, 168
        %v444 = vld [vmem:[%s443] sm:$0xf]
        %v445 = vld [vmem:[%s443 + $0x4] sm:$0xf]
        %v446 = vld [vmem:[%s443 + $0x8] sm:$0xf]
        %v447 = vld [vmem:[%s443 + $0xc] sm:$0xf]
        %v448 = vld [vmem:[%s443 + $0x10] sm:$0xf]
        %v449 = vld [vmem:[%s443 + $0x14] sm:$0xf]
        %v450 = vld [vmem:[%s443 + $0x18] sm:$0xf]
        %v451 = vld [vmem:[%s443 + $0x1c] sm:$0xf]
        %v452 = vld [vmem:[%s443 + $0x20] sm:$0xf]
        %v453 = vld [vmem:[%s443 + $0x24] sm:$0xf]
        %v454 = vld [vmem:[%s443 + $0x28] sm:$0xf]
        %v455 = vld [vmem:[%s443 + $0x2c] sm:$0xf]
        %v456 = vld [vmem:[%s443 + $0x30] sm:$0xf]
        %v457 = vld [vmem:[%s443 + $0x34] sm:$0x3]
        %v472 = vunpack.c.l.b16 %v444
        %v473 = vunpack.c.l.b16 %v445
        %v474 = vunpack.c.l.b16 %v446
        %v475 = vunpack.c.l.b16 %v447
        %v476 = vunpack.c.l.b16 %v448
        %v477 = vunpack.c.l.b16 %v449
        %v478 = vunpack.c.l.b16 %v450
        %v479 = vunpack.c.l.b16 %v451
        %v480 = vunpack.c.l.b16 %v452
        %v481 = vunpack.c.l.b16 %v453
        %v482 = vunpack.c.l.b16 %v454
        %v483 = vunpack.c.l.b16 %v455
        %v484 = vunpack.c.l.b16 %v456
        %v485 = vunpack.c.l.b16 %v457
        %v486 = vpack.c.b16 %v473, %v472
        %v487 = vpack.c.b16 %v475, %v474
        %v488 = vpack.c.b16 %v477, %v476
        %v489 = vpack.c.b16 %v479, %v478
        %v490 = vpack.c.b16 %v481, %v480
        %v491 = vpack.c.b16 %v483, %v482
        %v492 = vpack.c.b16 %v485, %v484
        %v500 = vsel %vm273, %v492, 0
        %502 = vmatpush.bf16.msra.mxu0 0
        %503 = vmatpush.bf16.msra.mxu0 %v500
        %504 = vmatpush.bf16.msra.mxu0 %v491
        %505 = vmatpush.bf16.msra.mxu0 %v490
        %506 = vmatpush.bf16.msra.mxu0 %v489
        %507 = vmatpush.bf16.msra.mxu0 %v488
        %508 = vmatpush.bf16.msra.mxu0 %v487
        %509 = vmatpush.bf16.msra.mxu0 %v486
        %510 = vmatmul.bf16.gmra.mxu0 %v271
        %v511 = vpop.f32.mrf.mxu0
        %v512 = vadd.f32 %v226, %v511
        %v513 = vpop.f32.mrf.mxu0
        %514 = vdwg.mxu0
        %vm515 = vcmp.ge.f32.partialorder %v512, 0.0
        %v516 = vmul.f32 %v512, 0.01
        %v517 = vsel %vm515, %v512, %v516
        %s518 = scalar_lea.vmem %s195, 224
        %v519 = vld [vmem:[%s518] sm:$0xf]
        %v520 = vld [vmem:[%s518 + $0x4] sm:$0xf]
        %v521 = vld [vmem:[%s518 + $0x8] sm:$0xf]
        %v522 = vld [vmem:[%s518 + $0xc] sm:$0xf]
        %v523 = vld [vmem:[%s518 + $0x10] sm:$0xf]
        %v524 = vld [vmem:[%s518 + $0x14] sm:$0xf]
        %v525 = vld [vmem:[%s518 + $0x18] sm:$0xf]
        %v526 = vld [vmem:[%s518 + $0x1c] sm:$0xf]
        %v527 = vld [vmem:[%s518 + $0x20] sm:$0xf]
        %v528 = vld [vmem:[%s518 + $0x24] sm:$0xf]
        %v529 = vld [vmem:[%s518 + $0x28] sm:$0xf]
        %v530 = vld [vmem:[%s518 + $0x2c] sm:$0xf]
        %v531 = vld [vmem:[%s518 + $0x30] sm:$0xf]
        %v532 = vld [vmem:[%s518 + $0x34] sm:$0x3]
        %v547 = vunpack.c.l.b16 %v519
        %v548 = vunpack.c.l.b16 %v520
        %v549 = vunpack.c.l.b16 %v521
        %v550 = vunpack.c.l.b16 %v522
        %v551 = vunpack.c.l.b16 %v523
        %v552 = vunpack.c.l.b16 %v524
        %v553 = vunpack.c.l.b16 %v525
        %v554 = vunpack.c.l.b16 %v526
        %v555 = vunpack.c.l.b16 %v527
        %v556 = vunpack.c.l.b16 %v528
        %v557 = vunpack.c.l.b16 %v529
        %v558 = vunpack.c.l.b16 %v530
        %v559 = vunpack.c.l.b16 %v531
        %v560 = vunpack.c.l.b16 %v532
        %v561 = vpack.c.b16 %v548, %v547
        %v562 = vpack.c.b16 %v550, %v549
        %v563 = vpack.c.b16 %v552, %v551
        %v564 = vpack.c.b16 %v554, %v553
        %v565 = vpack.c.b16 %v556, %v555
        %v566 = vpack.c.b16 %v558, %v557
        %v567 = vpack.c.b16 %v560, %v559
        %v575 = vsel %vm273, %v567, 0
        %577 = vmatpush.bf16.msra.mxu0 0
        %578 = vmatpush.bf16.msra.mxu0 %v575
        %579 = vmatpush.bf16.msra.mxu0 %v566
        %580 = vmatpush.bf16.msra.mxu0 %v565
        %581 = vmatpush.bf16.msra.mxu0 %v564
        %582 = vmatpush.bf16.msra.mxu0 %v563
        %583 = vmatpush.bf16.msra.mxu0 %v562
        %584 = vmatpush.bf16.msra.mxu0 %v561
        %585 = vmatmul.bf16.gmra.mxu0 %v271
        %v586 = vpop.f32.mrf.mxu0
        %v587 = vadd.f32 %v226, %v586
        %v588 = vpop.f32.mrf.mxu0
        %589 = vdwg.mxu0
        %vm590 = vcmp.ge.f32.partialorder %v587, 0.0
        %v591 = vmul.f32 %v587, 0.01
        %v592 = vsel %vm590, %v587, %v591
        %s593 = scalar_lea.vmem %s195, 280
        %v594 = vld [vmem:[%s593] sm:$0xf]
        %v595 = vld [vmem:[%s593 + $0x4] sm:$0xf]
        %v596 = vld [vmem:[%s593 + $0x8] sm:$0xf]
        %v597 = vld [vmem:[%s593 + $0xc] sm:$0xf]
        %v598 = vld [vmem:[%s593 + $0x10] sm:$0xf]
        %v599 = vld [vmem:[%s593 + $0x14] sm:$0xf]
        %v600 = vld [vmem:[%s593 + $0x18] sm:$0xf]
        %v601 = vld [vmem:[%s593 + $0x1c] sm:$0xf]
        %v602 = vld [vmem:[%s593 + $0x20] sm:$0xf]
        %v603 = vld [vmem:[%s593 + $0x24] sm:$0xf]
        %v604 = vld [vmem:[%s593 + $0x28] sm:$0xf]
        %v605 = vld [vmem:[%s593 + $0x2c] sm:$0xf]
        %v606 = vld [vmem:[%s593 + $0x30] sm:$0xf]
        %v607 = vld [vmem:[%s593 + $0x34] sm:$0x3]
        %v622 = vunpack.c.l.b16 %v594
        %v623 = vunpack.c.l.b16 %v595
        %v624 = vunpack.c.l.b16 %v596
        %v625 = vunpack.c.l.b16 %v597
        %v626 = vunpack.c.l.b16 %v598
        %v627 = vunpack.c.l.b16 %v599
        %v628 = vunpack.c.l.b16 %v600
        %v629 = vunpack.c.l.b16 %v601
        %v630 = vunpack.c.l.b16 %v602
        %v631 = vunpack.c.l.b16 %v603
        %v632 = vunpack.c.l.b16 %v604
        %v633 = vunpack.c.l.b16 %v605
        %v634 = vunpack.c.l.b16 %v606
        %v635 = vunpack.c.l.b16 %v607
        %v636 = vpack.c.b16 %v623, %v622
        %v637 = vpack.c.b16 %v625, %v624
        %v638 = vpack.c.b16 %v627, %v626
        %v639 = vpack.c.b16 %v629, %v628
        %v640 = vpack.c.b16 %v631, %v630
        %v641 = vpack.c.b16 %v633, %v632
        %v642 = vpack.c.b16 %v635, %v634
        %v650 = vsel %vm273, %v642, 0
        %652 = vmatpush.bf16.msra.mxu0 0
        %653 = vmatpush.bf16.msra.mxu0 %v650
        %654 = vmatpush.bf16.msra.mxu0 %v641
        %655 = vmatpush.bf16.msra.mxu0 %v640
        %656 = vmatpush.bf16.msra.mxu0 %v639
        %657 = vmatpush.bf16.msra.mxu0 %v638
        %658 = vmatpush.bf16.msra.mxu0 %v637
        %659 = vmatpush.bf16.msra.mxu0 %v636
        %660 = vmatmul.bf16.gmra.mxu0 %v271
        %v661 = vpop.f32.mrf.mxu0
        %v662 = vadd.f32 %v226, %v661
        %v663 = vpop.f32.mrf.mxu0
        %664 = vdwg.mxu0
        %vm665 = vcmp.ge.f32.partialorder %v662, 0.0
        %v666 = vmul.f32 %v662, 0.01
        %v667 = vsel %vm665, %v662, %v666
        %vm668 = vcmask 293888
        %v670 = vsel %vm668, %v292, 0
        %v673 = vsel %vm668, %v367, 0
        %v676 = vsel %vm668, %v442, 0
        %v679 = vsel %vm668, %v517, 0
        %v682 = vsel %vm668, %v592, 0
        %v685 = vsel %vm668, %v667, 0
        %vm687 = vcmask 1043456
        %v689 = vsel %vm687, %v207, 0
        %v692 = vsel %vm687, %v208, 0
        %694 = vmatpush.msra.mxu0 0.0
        %695 = vmatpush.msra.mxu0 0.0
        %696 = vmatpush.msra.mxu0 0.0
        %697 = vmatpush.msra.mxu0 0.0
        %698 = vmatpush.msra.mxu0 0.0
        %699 = vmatpush.msra.mxu0 0.0
        %700 = vmatpush.msra.mxu0 0.0
        %701 = vmatpush.msra.mxu0 0.0
        %702 = vmatpush.msra.mxu0 0.0
        %703 = vmatpush.msra.mxu0 0.0
        %704 = vmatpush.msra.mxu0 0.0
        %705 = vmatpush.msra.mxu0 %v689
        %706 = vmatpush.msra.mxu0 %v205
        %707 = vmatpush.msra.mxu0 %v203
        %708 = vmatpush.msra.mxu0 %v201
        %709 = vmatpush.msra.mxu0 %v199
        %710 = vmatmul.f32.gmra.mxu0 %v670
        %v711 = vpop.f32.mrf.mxu0
        %v712 = vadd.f32 0.0, %v711
        %713 = vmatmul.f32.gmra.mxu0 %v673
        %v714 = vpop.f32.mrf.mxu0
        %v715 = vadd.f32 0.0, %v714
        %716 = vmatmul.f32.gmra.mxu0 %v676
        %v717 = vpop.f32.mrf.mxu0
        %v718 = vadd.f32 0.0, %v717
        %719 = vmatmul.f32.gmra.mxu0 %v679
        %v720 = vpop.f32.mrf.mxu0
        %v721 = vadd.f32 0.0, %v720
        %722 = vmatmul.f32.gmra.mxu0 %v682
        %v723 = vpop.f32.mrf.mxu0
        %v724 = vadd.f32 0.0, %v723
        %725 = vmatmul.f32.gmra.mxu0 %v685
        %v726 = vpop.f32.mrf.mxu0
        %v727 = vadd.f32 0.0, %v726
        %728 = vdwg.mxu0
        %729 = vmatpush.msra.mxu0 0.0
        %730 = vmatpush.msra.mxu0 0.0
        %731 = vmatpush.msra.mxu0 0.0
        %732 = vmatpush.msra.mxu0 0.0
        %733 = vmatpush.msra.mxu0 0.0
        %734 = vmatpush.msra.mxu0 0.0
        %735 = vmatpush.msra.mxu0 0.0
        %736 = vmatpush.msra.mxu0 0.0
        %737 = vmatpush.msra.mxu0 0.0
        %738 = vmatpush.msra.mxu0 0.0
        %739 = vmatpush.msra.mxu0 0.0
        %740 = vmatpush.msra.mxu0 %v692
        %741 = vmatpush.msra.mxu0 %v206
        %742 = vmatpush.msra.mxu0 %v204
        %743 = vmatpush.msra.mxu0 %v202
        %744 = vmatpush.msra.mxu0 %v200
        %745 = vmatmul.f32.gmra.mxu0 %v670
        %v746 = vpop.f32.mrf.mxu0
        %v747 = vadd.f32 0.0, %v746
        %748 = vmatmul.f32.gmra.mxu0 %v673
        %v749 = vpop.f32.mrf.mxu0
        %v750 = vadd.f32 0.0, %v749
        %751 = vmatmul.f32.gmra.mxu0 %v676
        %v752 = vpop.f32.mrf.mxu0
        %v753 = vadd.f32 0.0, %v752
        %754 = vmatmul.f32.gmra.mxu0 %v679
        %v755 = vpop.f32.mrf.mxu0
        %v756 = vadd.f32 0.0, %v755
        %757 = vmatmul.f32.gmra.mxu0 %v682
        %v758 = vpop.f32.mrf.mxu0
        %v759 = vadd.f32 0.0, %v758
        %760 = vmatmul.f32.gmra.mxu0 %v685
        %v761 = vpop.f32.mrf.mxu0
        %v762 = vadd.f32 0.0, %v761
        %763 = vdwg.mxu0
        %764 = vst [vmem:[%s190] sm:$0xff] %v712
        %vm765 = vcmask 130048
        %766 = vst.msk [vmem:[%s190 + $0x8] sm:$0xff] %vm765, %v747
        %v767 = vmul.f32 %v712, 0.54545456
        %v768 = vmul.f32 %v747, 0.54545456
        %v769 = vmul.f32 %v715, 0.45454547
        %v770 = vmul.f32 %v750, 0.45454547
        %v771 = vadd.f32 %v767, %v769
        %v772 = vadd.f32 %v768, %v770
        %s773 = scalar_lea.vmem %s190, 16 [#allocation2]
        %774 = vst [vmem:[%s773] sm:$0xff] %v771
        %775 = vst.msk [vmem:[%s773 + $0x8] sm:$0xff] %vm765, %v772
        %v776 = vmul.f32 %v712, 0.09090909
        %v777 = vmul.f32 %v747, 0.09090909
        %v778 = vmul.f32 %v715, 0.90909094
        %v779 = vmul.f32 %v750, 0.90909094
        %v780 = vadd.f32 %v776, %v778
        %v781 = vadd.f32 %v777, %v779
        %s782 = scalar_lea.vmem %s190, 32 [#allocation2]
        %783 = vst [vmem:[%s782] sm:$0xff] %v780
        %784 = vst.msk [vmem:[%s782 + $0x8] sm:$0xff] %vm765, %v781
        %v785 = vmul.f32 %v715, 0.6363636
        %v786 = vmul.f32 %v750, 0.6363636
        %v787 = vmul.f32 %v718, 0.36363637
        %v788 = vmul.f32 %v753, 0.36363637
        %v789 = vadd.f32 %v785, %v787
        %v790 = vadd.f32 %v786, %v788
        %s791 = scalar_lea.vmem %s190, 48 [#allocation2]
        %792 = vst [vmem:[%s791] sm:$0xff] %v789
        %793 = vst.msk [vmem:[%s791 + $0x8] sm:$0xff] %vm765, %v790
        %v794 = vmul.f32 %v715, 0.18181819
        %v795 = vmul.f32 %v750, 0.18181819
        %v796 = vmul.f32 %v718, 0.8181818
        %v797 = vmul.f32 %v753, 0.8181818
        %v798 = vadd.f32 %v794, %v796
        %v799 = vadd.f32 %v795, %v797
        %s800 = scalar_lea.vmem %s190, 64 [#allocation2]
        %801 = vst [vmem:[%s800] sm:$0xff] %v798
        %802 = vst.msk [vmem:[%s800 + $0x8] sm:$0xff] %vm765, %v799
        %v803 = vmul.f32 %v718, 0.72727275
        %v804 = vmul.f32 %v753, 0.72727275
        %v805 = vmul.f32 %v721, 0.27272728
        %v806 = vmul.f32 %v756, 0.27272728
        %v807 = vadd.f32 %v803, %v805
        %v808 = vadd.f32 %v804, %v806
        %s809 = scalar_lea.vmem %s190, 80 [#allocation2]
        %810 = vst [vmem:[%s809] sm:$0xff] %v807
        %811 = vst.msk [vmem:[%s809 + $0x8] sm:$0xff] %vm765, %v808
        %v812 = vmul.f32 %v718, 0.27272728
        %v813 = vmul.f32 %v753, 0.27272728
        %v814 = vmul.f32 %v721, 0.72727275
        %v815 = vmul.f32 %v756, 0.72727275
        %v816 = vadd.f32 %v812, %v814
        %v817 = vadd.f32 %v813, %v815
        %s818 = scalar_lea.vmem %s190, 96 [#allocation2]
        %819 = vst [vmem:[%s818] sm:$0xff] %v816
        %820 = vst.msk [vmem:[%s818 + $0x8] sm:$0xff] %vm765, %v817
        %v821 = vmul.f32 %v721, 0.8181818
        %v822 = vmul.f32 %v756, 0.8181818
        %v823 = vmul.f32 %v724, 0.18181819
        %v824 = vmul.f32 %v759, 0.18181819
        %v825 = vadd.f32 %v821, %v823
        %v826 = vadd.f32 %v822, %v824
        %s827 = scalar_lea.vmem %s190, 112 [#allocation2]
        %828 = vst [vmem:[%s827] sm:$0xff] %v825
        %829 = vst.msk [vmem:[%s827 + $0x8] sm:$0xff] %vm765, %v826
        %v830 = vmul.f32 %v721, 0.36363637
        %v831 = vmul.f32 %v756, 0.36363637
        %v832 = vmul.f32 %v724, 0.6363636
        %v833 = vmul.f32 %v759, 0.6363636
        %v834 = vadd.f32 %v830, %v832
        %v835 = vadd.f32 %v831, %v833
        %s836 = scalar_lea.vmem %s190, 128 [#allocation2]
        %837 = vst [vmem:[%s836] sm:$0xff] %v834
        %838 = vst.msk [vmem:[%s836 + $0x8] sm:$0xff] %vm765, %v835
        %v839 = vmul.f32 %v724, 0.90909094
        %v840 = vmul.f32 %v759, 0.90909094
        %v841 = vmul.f32 %v727, 0.09090909
        %v842 = vmul.f32 %v762, 0.09090909
        %v843 = vadd.f32 %v839, %v841
        %v844 = vadd.f32 %v840, %v842
        %s845 = scalar_lea.vmem %s190, 144 [#allocation2]
        %846 = vst [vmem:[%s845] sm:$0xff] %v843
        %847 = vst.msk [vmem:[%s845 + $0x8] sm:$0xff] %vm765, %v844
        %v848 = vmul.f32 %v724, 0.45454547
        %v849 = vmul.f32 %v759, 0.45454547
        %v850 = vmul.f32 %v727, 0.54545456
        %v851 = vmul.f32 %v762, 0.54545456
        %v852 = vadd.f32 %v848, %v850
        %v853 = vadd.f32 %v849, %v851
        %s854 = scalar_lea.vmem %s190, 160 [#allocation2]
        %855 = vst [vmem:[%s854] sm:$0xff] %v852
        %856 = vst.msk [vmem:[%s854 + $0x8] sm:$0xff] %vm765, %v853
        %s857 = scalar_lea.vmem %s190, 176 [#allocation2]
        %858 = vst [vmem:[%s857] sm:$0xff] %v727
        %859 = vst.msk [vmem:[%s857 + $0x8] sm:$0xff] %vm765, %v762
        %s860 = sand.u32 %s115, 1
        %s861 = scalar_lea.sflag [#allocation3], %s860
        %s862 = sand.u32 %s115, 1
        %s863 = smul.addr %s862, 192
        %s864 = scalar_lea.vmem [#allocation2], %s863
        // Predicated region
        $region37: #{tpu_custom_call.1} parent=35 // pred_check
          %p865 = pneg %p125
        $region38: #{tpu_custom_call.1} parent=35 // pred_check_branch
          %867 = sbr.rel (%p865) target = $region40
        $region39: #{tpu_custom_call.1} parent=35 // pred_region
          %869 = vsyncadd %s861, 0
          %s870 = smul.addr %s18, 24
          %s871 = smul.addr %s870, 8
          %s872 = scalar_lea.hbm %s4, %s871
          %s873 = sshll.u32 %s864, 4
          %s874 = int_to_ptr.vmem [resolvable:$true] %s873
          %s875 = sshll.u32 %s872, 4
          %s876 = int_to_ptr.hbm [resolvable:$true] %s875
          %881 = dma.vmem_to_hbm [thread:$0]  %s874, 3072, %s876, %s861, 256, 256, 16
        $region40: #{tpu_custom_call.1} parent=35 // pred_fallthru
          _
      $region36: #{tpu_custom_call.1} parent=5 // pred_fallthru
        _
      %p882 = scmp.le.s32.totalorder 2, %s13
      // Predicated region
      $region41: #{tpu_custom_call.1} parent=5 // pred_check
        %p883 = pneg %p882
      $region42: #{tpu_custom_call.1} parent=5 // pred_check_branch
        %885 = sbr.rel (%p883) target = $region44
      $region43: #{tpu_custom_call.1} parent=5 // pred_region
        %s886 = ssub.s32 %s13, 2
        // Predicated region
        $region45: #{tpu_custom_call.1} parent=43 // pred_check
          %p887 = pneg %p131
        $region46: #{tpu_custom_call.1} parent=43 // pred_check_branch
          %889 = sbr.rel (%p887) target = $region48
        $region47: #{tpu_custom_call.1} parent=43 // pred_region
          %s890 = sand.u32 %s116, 1
          %s891 = scalar_lea.sflag [#allocation3], %s890
          %s892 = sand.u32 %s116, 1
          %s893 = smul.addr %s892, 192
          %s894 = scalar_lea.vmem [#allocation2], %s893
          %896 = dma.done %s891, 3072
        $region48: #{tpu_custom_call.1} parent=43 // pred_fallthru
          _
      $region44: #{tpu_custom_call.1} parent=5 // pred_fallthru
        _
    $region6: #{tpu_custom_call.1} parent=1 // loop_footer
      %s17 = sadd.s32 1, %s13
    $region7: #{tpu_custom_call.1} parent=1 // loop_footer_branch
      %12 = sbr.rel target = $region3
    $region8: #{tpu_custom_call.1} parent=1 // loop_exit
      _
    %897 = vsyncpa [#allocation3], 1
    %s898 = scalar_lea.sflag [#allocation3], 1
    %899 = vsyncpa %s898, 1

</llo_original>
